<compile_context>
chip_gen: v5e
topology: v5e:2x2
jax: 0.10.0
libtpu: 0.0.40
codegen_flags: <defaults>
</compile_context>

<pallas_src>
import functools
import math

import jax
import jax.numpy as jnp
from jax.experimental import pallas as pl
from jax.experimental.pallas import tpu as pltpu


def _round_up(x, m):
    return -(-x // m) * m


def _pick_tile_rows(H, W, Cp, Cout_p, hb, max_tile_lanes):
    """Rows per spatial tile.  TH*W must be a multiple of `hb` so the halo
    fetches land on lane-block boundaries; size is capped by a VMEM budget and
    by the (padded) image height."""
    unit = hb // math.gcd(W, hb)                  # smallest TH with TH*W % hb == 0
    # f32 bytes per tile lane: slab 9*Cp, ext Cp, 2x-buffered input 2*Cp,
    # 2x-buffered fused output 2*Cout_p, ~2*Cp transient tap values.
    per_lane_bytes = 4 * (9 * Cp + 5 * Cp + 2 * Cout_p)
    budget_bytes = 20 * 1024 * 1024               # headroom under 32 MiB scoped VMEM
    lane_cap = max(unit * W, min(max_tile_lanes, budget_bytes // per_lane_bytes))
    n_units = max(1, min(lane_cap // (unit * W), -(-H // unit)))
    return unit * n_units


def _pshead_kernel(xc_ref, xp_ref, xn_ref, w_ref, out_ref, ext_ref, slab_ref,
                   *, W, Hb):
    """One (batch, row-tile) grid step.

    xc_ref:  (1, Cp, TW)       current tile: TH image rows flattened on lanes
    xp_ref:  (1, Cp, Hb)       lanes just before the tile (prev tile tail)
    xn_ref:  (1, Cp, Hb)       lanes just after the tile (next tile head)
    w_ref:   (Cout_p, 9*Cp)    fused slot+mark weights, im2col layout
    out_ref: (1, Cout_p, TW)   fused sigmoid(conv) outputs for both heads
    ext_ref: (Cp, Hb+TW+Hb)    scratch: tile + one halo row on each side
    slab_ref:(9*Cp, TW)        scratch: im2col patch slab
    """
    Cp = xc_ref.shape[1]
    TW = xc_ref.shape[2]
    L = TW + 2 * Hb
    j = pl.program_id(1)
    n_tiles = pl.num_programs(1)

    # Assemble the halo-extended strip.  Zeroing the halo at the first/last
    # tile reproduces the conv's zero padding in the y direction, so no dy
    # masks are needed anywhere.
    ext_ref[:, Hb:Hb + TW] = xc_ref[0]
    ext_ref[:, 0:Hb] = jnp.where(j > 0, xp_ref[0], 0.0)
    ext_ref[:, Hb + TW:L] = jnp.where(j < n_tiles - 1, xn_ref[0], 0.0)

    # Factorized column-boundary masks (conv zero padding in the x direction).
    col = jax.lax.broadcasted_iota(jnp.int32, (Cp, TW), 1) % W
    ok_left = col > 0            # dx = -1 taps
    ok_right = col < W - 1       # dx = +1 taps

    ext = ext_ref[...]
    t = 0
    for dy in (-1, 0, 1):
        if dy == 0:
            base = xc_ref[0]                                   # (Cp, TW)
        else:
            # base[:, ol] = ext[:, Hb + dy*W + ol]  (row h+dy, same column)
            shift = (L - (Hb + dy * W)) % L
            base = pltpu.roll(ext, shift, 1)[:, :TW]
        for dx in (-1, 0, 1):
            if dx == 0:
                sh = base
            else:
                # Cyclic wrap positions land only on dx-masked columns.
                sh = pltpu.roll(base, (TW - dx) % TW, 1)
                sh = jnp.where(ok_left if dx == -1 else ok_right, sh, 0.0)
            slab_ref[t * Cp:(t + 1) * Cp, :] = sh
            t += 1

    # Single MXU matmul for both heads: (Cout_p, 9*Cp) @ (9*Cp, TW).
    acc = jnp.dot(w_ref[...], slab_ref[...], preferred_element_type=jnp.float32)
    out_ref[0] = jax.nn.sigmoid(acc)


@functools.partial(jax.jit, static_argnames=("max_tile_lanes",))
def pshead_forward(x_nchw, w_slot_oihw, w_mark_oihw, *, max_tile_lanes=8192):
    """x: (N, C, H, W) f32, weights in PyTorch OIHW (Cout, C, 3, 3).

    Returns (slot (N, Cs, H, W), mark (N, Cm, H, W)), matching
    sigmoid(conv2d(x, w, padding=1, bias=False)).
    """
    N, C, H, W = x_nchw.shape
    Cs = w_slot_oihw.shape[0]
    Cm = w_mark_oihw.shape[0]
    Cout = Cs + Cm
    Cp = _round_up(max(C, 1), 8)                 # channels -> whole sublane tiles
    Cout_p = _round_up(max(Cout, 1), 8)          # fused output -> whole sublane tiles
    Hb = (W // 128 + 1) * 128                    # halo lane-block (>= W+1, mult. of 128)

    TH = _pick_tile_rows(H, W, Cp, Cout_p, Hb, max_tile_lanes)
    nT = -(-H // TH)                             # spatial tiles per image
    Ht = nT * TH                                 # row-padded height
    TW = TH * W                                  # lanes per tile (multiple of 128)
    Lp = Ht * W                                  # padded flattened spatial extent
    R = TW // Hb                                 # halo blocks per tile

    # Input: NCHW -> channel-pad to Cp, row-pad to Ht, flatten spatial to lanes.
    xp = jnp.pad(x_nchw, ((0, 0), (0, Cp - C), (0, Ht - H), (0, 0)))
    x_flat = xp.reshape(N, Cp, Lp).astype(jnp.float32)

    # Fused conv weights, im2col layout: w_mat[o, t*Cp + c] = w[o, c, ky, kx],
    # t = ky*3 + kx.  Rows [0:Cs] slot, [Cs:Cout] mark, [Cout:Cout_p] zero pad.
    w_all = jnp.concatenate([w_slot_oihw, w_mark_oihw], axis=0)       # (Cout, C, 3, 3)
    w_all = jnp.pad(w_all, ((0, Cout_p - Cout), (0, Cp - C), (0, 0), (0, 0)))
    w_mat = jnp.transpose(w_all, (0, 2, 3, 1)).reshape(Cout_p, 9 * Cp)
    w_mat = w_mat.astype(jnp.float32)

    kernel = functools.partial(_pshead_kernel, W=W, Hb=Hb)

    cost = pl.CostEstimate(
        flops=2 * N * Cout_p * 9 * Cp * Lp,
        transcendentals=N * Cout_p * Lp,
        bytes_accessed=4 * (N * Cp * Lp + Cout_p * 9 * Cp + N * Cout_p * Lp),
    )

    out_flat = pl.pallas_call(
        kernel,
        out_shape=jax.ShapeDtypeStruct((N, Cout_p, Lp), jnp.float32),
        grid_spec=pltpu.PrefetchScalarGridSpec(
            num_scalar_prefetch=0,
            grid=(N, nT),
            in_specs=[
                # current tile
                pl.BlockSpec((1, Cp, TW), lambda b, j: (b, 0, j)),
                # tail of the previous tile (clamped; zeroed in-kernel at j==0)
                pl.BlockSpec((1, Cp, Hb),
                             lambda b, j: (b, 0, jnp.maximum(j * R - 1, 0))),
                # head of the next tile (clamped; zeroed in-kernel at j==nT-1)
                pl.BlockSpec((1, Cp, Hb),
                             lambda b, j: (b, 0, jnp.minimum((j + 1) * R,
                                                             nT * R - 1))),
                # fused weights (resident)
                pl.BlockSpec((Cout_p, 9 * Cp), lambda b, j: (0, 0)),
            ],
            out_specs=pl.BlockSpec((1, Cout_p, TW), lambda b, j: (b, 0, j)),
            scratch_shapes=[
                pltpu.VMEM((Cp, TW + 2 * Hb), jnp.float32),   # halo-extended strip
                pltpu.VMEM((9 * Cp, TW), jnp.float32),        # im2col slab
            ],
        ),
        compiler_params=pltpu.CompilerParams(
            dimension_semantics=("parallel", "parallel"),
            vmem_limit_bytes=32 * 1024 * 1024,
        ),
        cost_estimate=cost,
    )(x_flat, x_flat, x_flat, w_mat)

    # Drop padding, split the fused output back into PyTorch's two NCHW heads
    # (free-ish wrapper slices/reshapes; no transposes).
    out = out_flat[:, :Cout, :H * W].reshape(N, Cout, H, W)
    return out[:, :Cs], out[:, Cs:]


def _reference(x_nchw, w_slot_oihw, w_mark_oihw):
    """Pure-JAX reference (lax.conv) for correctness checking."""
    def conv(x, w_oihw):
        return jax.lax.conv_general_dilated(
            x, w_oihw, window_strides=(1, 1), padding="SAME",
            dimension_numbers=("NCHW", "OIHW", "NCHW"))
    return (jax.nn.sigmoid(conv(x_nchw, w_slot_oihw)),
            jax.nn.sigmoid(conv(x_nchw, w_mark_oihw)))


def _check(x, w_slot, w_mark, **kwargs):
    slot_out, mark_out = pshead_forward(x, w_slot, w_mark, **kwargs)
    jax.block_until_ready((slot_out, mark_out))
    ref_slot, ref_mark = _reference(x, w_slot, w_mark)
    assert slot_out.shape == ref_slot.shape
    assert mark_out.shape == ref_mark.shape
    assert jnp.allclose(slot_out, ref_slot, atol=1e-5, rtol=1e-5)
    assert jnp.allclose(mark_out, ref_mark, atol=1e-5, rtol=1e-5)
    return slot_out, mark_out


if __name__ == "__main__":
    # Small synthetic config consistent with PSHead:
    #   ch = sum(hrn_out_channel) = 4, feature_map_size = 16,
    #   slot_channel = 6, mark_channel = 5
    N, C, H, W = 2, 4, 16, 16
    SLOT_CH, MARK_CH = 6, 5

    key = jax.random.PRNGKey(0)
    kx, kws, kwm, kx2, kws2, kwm2 = jax.random.split(key, 6)

    x = jax.random.normal(kx, (N, C, H, W), dtype=jnp.float32)
    # PyTorch-native OIHW conv weights (Cout, Cin, 3, 3).
    w_slot = 0.1 * jax.random.normal(kws, (SLOT_CH, C, 3, 3), dtype=jnp.float32)
    w_mark = 0.1 * jax.random.normal(kwm, (MARK_CH, C, 3, 3), dtype=jnp.float32)

    # 1) Main config (single spatial tile per image).
    slot_out, mark_out = _check(x, w_slot, w_mark)
    assert slot_out.shape == (N, SLOT_CH, H, W)
    assert mark_out.shape == (N, MARK_CH, H, W)

    # 2) Same config with a forced small tile -> exercises the multi-tile
    #    halo path (two row-tiles per image).
    _check(x, w_slot, w_mark, max_tile_lanes=128)

    # 3) Ragged config: C not a multiple of 8, H*W not a multiple of 128.
    C2, H2, W2 = 3, 20, 20
    x2 = jax.random.normal(kx2, (N, C2, H2, W2), dtype=jnp.float32)
    w_slot2 = 0.1 * jax.random.normal(kws2, (SLOT_CH, C2, 3, 3), dtype=jnp.float32)
    w_mark2 = 0.1 * jax.random.normal(kwm2, (MARK_CH, C2, 3, 3), dtype=jnp.float32)
    _check(x2, w_slot2, w_mark2)

    print("KERNEL_OK")
</pallas_src>

<mosaic_0001>
module attributes {stable_mosaic.version = 11 : i64} {
  func.func @_pshead_kernel(%arg0: i32, %arg1: i32, %arg2: memref<1x8x256xf32, #tpu.memory_space<vmem>>, %arg3: memref<1x8x128xf32, #tpu.memory_space<vmem>>, %arg4: memref<1x8x128xf32, #tpu.memory_space<vmem>>, %arg5: memref<16x72xf32, #tpu.memory_space<vmem>>, %arg6: memref<1x16x256xf32, #tpu.memory_space<vmem>>, %arg7: memref<8x512xf32, #tpu.memory_space<vmem>>, %arg8: memref<72x256xf32, #tpu.memory_space<vmem>>) attributes {dimension_semantics = [#tpu.dimension_semantics<parallel>, #tpu.dimension_semantics<parallel>], iteration_bounds = array<i64: 2, 1>, scalar_prefetch = 0 : i64, scratch_operands = 2 : i64, tpu.core_type = #tpu.core_type<tc>, window_params = [{transform_indices = @transform_0, window_bounds = array<i64: 1, 8, 256>}, {transform_indices = @transform_1, window_bounds = array<i64: 1, 8, 128>}, {transform_indices = @transform_2, window_bounds = array<i64: 1, 8, 128>}, {pipeline_mode = #tpu.pipeline_mode<synchronous>, transform_indices = @transform_3, window_bounds = array<i64: 16, 72>}, {transform_indices = @transform_4, window_bounds = array<i64: 1, 16, 256>}]} {
    %c0 = arith.constant 0 : index
    %c0_0 = arith.constant 0 : index
    %c0_1 = arith.constant 0 : index
    %0 = vector.load %arg2[%c0, %c0_0, %c0_1] : memref<1x8x256xf32, #tpu.memory_space<vmem>>, vector<1x8x256xf32>
    %1 = vector.shape_cast %0 : vector<1x8x256xf32> to vector<8x256xf32>
    %c0_2 = arith.constant 0 : index
    %c128 = arith.constant 128 : index
    %2 = vector.load %arg7[%c0_2, %c128] : memref<8x512xf32, #tpu.memory_space<vmem>>, vector<8x256xf32>
    tpu.vector_store %arg7[%c0_2, %c128], %1 {strides = array<i32>} : memref<8x512xf32, #tpu.memory_space<vmem>>, vector<8x256xf32>,
    %c0_i32 = arith.constant 0 : i32
    %3 = arith.cmpi sgt, %arg1, %c0_i32 : i32
    %c0_3 = arith.constant 0 : index
    %c0_4 = arith.constant 0 : index
    %c0_5 = arith.constant 0 : index
    %4 = vector.load %arg3[%c0_3, %c0_4, %c0_5] : memref<1x8x128xf32, #tpu.memory_space<vmem>>, vector<1x8x128xf32>
    %5 = vector.shape_cast %4 : vector<1x8x128xf32> to vector<8x128xf32>
    %cst = arith.constant 0.000000e+00 : f32
    %6 = vector.broadcast %cst : f32 to vector<8x128xf32>
    %7 = arith.select %3, %5, %6 : vector<8x128xf32>
    %c0_6 = arith.constant 0 : index
    %c0_7 = arith.constant 0 : index
    %8 = vector.load %arg7[%c0_6, %c0_7] : memref<8x512xf32, #tpu.memory_space<vmem>>, vector<8x128xf32>
    tpu.vector_store %arg7[%c0_6, %c0_7], %7 {strides = array<i32>} : memref<8x512xf32, #tpu.memory_space<vmem>>, vector<8x128xf32>,
    %c0_i32_8 = arith.constant 0 : i32
    %9 = arith.cmpi slt, %arg1, %c0_i32_8 : i32
    %c0_9 = arith.constant 0 : index
    %c0_10 = arith.constant 0 : index
    %c0_11 = arith.constant 0 : index
    %10 = vector.load %arg4[%c0_9, %c0_10, %c0_11] : memref<1x8x128xf32, #tpu.memory_space<vmem>>, vector<1x8x128xf32>
    %11 = vector.shape_cast %10 : vector<1x8x128xf32> to vector<8x128xf32>
    %cst_12 = arith.constant 0.000000e+00 : f32
    %12 = vector.broadcast %cst_12 : f32 to vector<8x128xf32>
    %13 = arith.select %9, %11, %12 : vector<8x128xf32>
    %c0_13 = arith.constant 0 : index
    %c384 = arith.constant 384 : index
    %14 = vector.load %arg7[%c0_13, %c384] : memref<8x512xf32, #tpu.memory_space<vmem>>, vector<8x128xf32>
    tpu.vector_store %arg7[%c0_13, %c384], %13 {strides = array<i32>} : memref<8x512xf32, #tpu.memory_space<vmem>>, vector<8x128xf32>,
    %15 = tpu.iota {dimensions = array<i32: 1>} : vector<8x256xi32>
    %c16_i32 = arith.constant 16 : i32
    %c0_i32_14 = arith.constant 0 : i32
    %16 = arith.cmpi eq, %c16_i32, %c0_i32_14 : i32
    %c1_i32 = arith.constant 1 : i32
    %17 = arith.select %16, %c1_i32, %c16_i32 : i32
    %18 = vector.broadcast %17 : i32 to vector<8x256xi32>
    %19 = arith.remsi %15, %18 : vector<8x256xi32>
    %c0_i32_15 = arith.constant 0 : i32
    %20 = vector.broadcast %c0_i32_15 : i32 to vector<8x256xi32>
    %21 = arith.cmpi ne, %19, %20 : vector<8x256xi32>
    %c0_i32_16 = arith.constant 0 : i32
    %22 = vector.broadcast %c0_i32_16 : i32 to vector<8x256xi32>
    %23 = arith.cmpi slt, %19, %22 : vector<8x256xi32>
    %c0_i32_17 = arith.constant 0 : i32
    %24 = arith.cmpi slt, %17, %c0_i32_17 : i32
    %25 = vector.broadcast %24 : i1 to vector<8x256xi1>
    %26 = vector.broadcast %25 : vector<8x256xi1> to vector<8x256xi1>
    %27 = arith.xori %23, %26 : vector<8x256xi1>
    %28 = arith.andi %27, %21 : vector<8x256xi1>
    %29 = vector.broadcast %17 : i32 to vector<8x256xi32>
    %30 = arith.addi %19, %29 : vector<8x256xi32>
    %31 = arith.select %28, %30, %19 : vector<8x256xi1>, vector<8x256xi32>
    %c0_i32_18 = arith.constant 0 : i32
    %32 = vector.broadcast %c0_i32_18 : i32 to vector<8x256xi32>
    %33 = arith.cmpi sgt, %31, %32 : vector<8x256xi32>
    %c15_i32 = arith.constant 15 : i32
    %34 = vector.broadcast %c15_i32 : i32 to vector<8x256xi32>
    %35 = arith.cmpi slt, %31, %34 : vector<8x256xi32>
    %c0_19 = arith.constant 0 : index
    %c0_20 = arith.constant 0 : index
    %36 = vector.load %arg7[%c0_19, %c0_20] : memref<8x512xf32, #tpu.memory_space<vmem>>, vector<8x512xf32>
    %c400_i32 = arith.constant 400 : i32
    %37 = tpu.dynamic_rotate %36 by %c400_i32 dim 1 : vector<8x512xf32>, i32 -> vector<8x512xf32>
    %38 = vector.extract_strided_slice %37 {offsets = [0, 0], sizes = [8, 256], strides = [1, 1]} : vector<8x512xf32> to vector<8x256xf32>
    %c1_i32_21 = arith.constant 1 : i32
    %39 = tpu.dynamic_rotate %38 by %c1_i32_21 dim 1 : vector<8x256xf32>, i32 -> vector<8x256xf32>
    %cst_22 = arith.constant 0.000000e+00 : f32
    %40 = vector.broadcast %cst_22 : f32 to vector<8x256xf32>
    %41 = arith.select %33, %39, %40 : vector<8x256xi1>, vector<8x256xf32>
    %c0_23 = arith.constant 0 : index
    %c0_24 = arith.constant 0 : index
    %42 = vector.load %arg8[%c0_23, %c0_24] : memref<72x256xf32, #tpu.memory_space<vmem>>, vector<8x256xf32>
    tpu.vector_store %arg8[%c0_23, %c0_24], %41 {strides = array<i32>} : memref<72x256xf32, #tpu.memory_space<vmem>>, vector<8x256xf32>,
    %c8 = arith.constant 8 : index
    %c0_25 = arith.constant 0 : index
    %43 = vector.load %arg8[%c8, %c0_25] : memref<72x256xf32, #tpu.memory_space<vmem>>, vector<8x256xf32>
    tpu.vector_store %arg8[%c8, %c0_25], %38 {strides = array<i32>} : memref<72x256xf32, #tpu.memory_space<vmem>>, vector<8x256xf32>,
    %c255_i32 = arith.constant 255 : i32
    %44 = tpu.dynamic_rotate %38 by %c255_i32 dim 1 : vector<8x256xf32>, i32 -> vector<8x256xf32>
    %cst_26 = arith.constant 0.000000e+00 : f32
    %45 = vector.broadcast %cst_26 : f32 to vector<8x256xf32>
    %46 = arith.select %35, %44, %45 : vector<8x256xi1>, vector<8x256xf32>
    %c16 = arith.constant 16 : index
    %c0_27 = arith.constant 0 : index
    %47 = vector.load %arg8[%c16, %c0_27] : memref<72x256xf32, #tpu.memory_space<vmem>>, vector<8x256xf32>
    tpu.vector_store %arg8[%c16, %c0_27], %46 {strides = array<i32>} : memref<72x256xf32, #tpu.memory_space<vmem>>, vector<8x256xf32>,
    %c0_28 = arith.constant 0 : index
    %c0_29 = arith.constant 0 : index
    %c0_30 = arith.constant 0 : index
    %48 = vector.load %arg2[%c0_28, %c0_29, %c0_30] : memref<1x8x256xf32, #tpu.memory_space<vmem>>, vector<1x8x256xf32>
    %49 = vector.shape_cast %48 : vector<1x8x256xf32> to vector<8x256xf32>
    %c1_i32_31 = arith.constant 1 : i32
    %50 = tpu.dynamic_rotate %49 by %c1_i32_31 dim 1 : vector<8x256xf32>, i32 -> vector<8x256xf32>
    %cst_32 = arith.constant 0.000000e+00 : f32
    %51 = vector.broadcast %cst_32 : f32 to vector<8x256xf32>
    %52 = arith.select %33, %50, %51 : vector<8x256xi1>, vector<8x256xf32>
    %c24 = arith.constant 24 : index
    %c0_33 = arith.constant 0 : index
    %53 = vector.load %arg8[%c24, %c0_33] : memref<72x256xf32, #tpu.memory_space<vmem>>, vector<8x256xf32>
    tpu.vector_store %arg8[%c24, %c0_33], %52 {strides = array<i32>} : memref<72x256xf32, #tpu.memory_space<vmem>>, vector<8x256xf32>,
    %c32 = arith.constant 32 : index
    %c0_34 = arith.constant 0 : index
    %54 = vector.load %arg8[%c32, %c0_34] : memref<72x256xf32, #tpu.memory_space<vmem>>, vector<8x256xf32>
    tpu.vector_store %arg8[%c32, %c0_34], %49 {strides = array<i32>} : memref<72x256xf32, #tpu.memory_space<vmem>>, vector<8x256xf32>,
    %c255_i32_35 = arith.constant 255 : i32
    %55 = tpu.dynamic_rotate %49 by %c255_i32_35 dim 1 : vector<8x256xf32>, i32 -> vector<8x256xf32>
    %cst_36 = arith.constant 0.000000e+00 : f32
    %56 = vector.broadcast %cst_36 : f32 to vector<8x256xf32>
    %57 = arith.select %35, %55, %56 : vector<8x256xi1>, vector<8x256xf32>
    %c40 = arith.constant 40 : index
    %c0_37 = arith.constant 0 : index
    %58 = vector.load %arg8[%c40, %c0_37] : memref<72x256xf32, #tpu.memory_space<vmem>>, vector<8x256xf32>
    tpu.vector_store %arg8[%c40, %c0_37], %57 {strides = array<i32>} : memref<72x256xf32, #tpu.memory_space<vmem>>, vector<8x256xf32>,
    %c368_i32 = arith.constant 368 : i32
    %59 = tpu.dynamic_rotate %36 by %c368_i32 dim 1 : vector<8x512xf32>, i32 -> vector<8x512xf32>
    %60 = vector.extract_strided_slice %59 {offsets = [0, 0], sizes = [8, 256], strides = [1, 1]} : vector<8x512xf32> to vector<8x256xf32>
    %c1_i32_38 = arith.constant 1 : i32
    %61 = tpu.dynamic_rotate %60 by %c1_i32_38 dim 1 : vector<8x256xf32>, i32 -> vector<8x256xf32>
    %cst_39 = arith.constant 0.000000e+00 : f32
    %62 = vector.broadcast %cst_39 : f32 to vector<8x256xf32>
    %63 = arith.select %33, %61, %62 : vector<8x256xi1>, vector<8x256xf32>
    %c48 = arith.constant 48 : index
    %c0_40 = arith.constant 0 : index
    %64 = vector.load %arg8[%c48, %c0_40] : memref<72x256xf32, #tpu.memory_space<vmem>>, vector<8x256xf32>
    tpu.vector_store %arg8[%c48, %c0_40], %63 {strides = array<i32>} : memref<72x256xf32, #tpu.memory_space<vmem>>, vector<8x256xf32>,
    %c56 = arith.constant 56 : index
    %c0_41 = arith.constant 0 : index
    %65 = vector.load %arg8[%c56, %c0_41] : memref<72x256xf32, #tpu.memory_space<vmem>>, vector<8x256xf32>
    tpu.vector_store %arg8[%c56, %c0_41], %60 {strides = array<i32>} : memref<72x256xf32, #tpu.memory_space<vmem>>, vector<8x256xf32>,
    %c255_i32_42 = arith.constant 255 : i32
    %66 = tpu.dynamic_rotate %60 by %c255_i32_42 dim 1 : vector<8x256xf32>, i32 -> vector<8x256xf32>
    %cst_43 = arith.constant 0.000000e+00 : f32
    %67 = vector.broadcast %cst_43 : f32 to vector<8x256xf32>
    %68 = arith.select %35, %66, %67 : vector<8x256xi1>, vector<8x256xf32>
    %c64 = arith.constant 64 : index
    %c0_44 = arith.constant 0 : index
    %69 = vector.load %arg8[%c64, %c0_44] : memref<72x256xf32, #tpu.memory_space<vmem>>, vector<8x256xf32>
    tpu.vector_store %arg8[%c64, %c0_44], %68 {strides = array<i32>} : memref<72x256xf32, #tpu.memory_space<vmem>>, vector<8x256xf32>,
    %c0_45 = arith.constant 0 : index
    %c0_46 = arith.constant 0 : index
    %70 = vector.load %arg5[%c0_45, %c0_46] : memref<16x72xf32, #tpu.memory_space<vmem>>, vector<16x72xf32>
    %c0_47 = arith.constant 0 : index
    %c0_48 = arith.constant 0 : index
    %71 = vector.load %arg8[%c0_47, %c0_48] : memref<72x256xf32, #tpu.memory_space<vmem>>, vector<72x256xf32>
    %cst_49 = arith.constant dense<0.000000e+00> : vector<16x256xf32>
    %72 = tpu.matmul %70, %71, %cst_49 {dimension_numbers = #tpu.dot_dimension_numbers<[1], [0], [0], [1], [0, 0, 1, 1], [], []>} : vector<16x72xf32>, vector<72x256xf32>, vector<16x256xf32> -> vector<16x256xf32>
    %73 = arith.negf %72 : vector<16x256xf32>
    %74 = math.exp %73 : vector<16x256xf32>
    %cst_50 = arith.constant 1.000000e+00 : f32
    %75 = vector.broadcast %cst_50 : f32 to vector<16x256xf32>
    %76 = arith.addf %75, %74 : vector<16x256xf32>
    %77 = arith.divf %75, %76 : vector<16x256xf32>
    %c0_51 = arith.constant 0 : index
    %c0_52 = arith.constant 0 : index
    %c0_53 = arith.constant 0 : index
    %78 = vector.load %arg6[%c0_51, %c0_52, %c0_53] : memref<1x16x256xf32, #tpu.memory_space<vmem>>, vector<1x16x256xf32>
    %79 = vector.shape_cast %78 : vector<1x16x256xf32> to vector<16x256xf32>
    %80 = vector.shape_cast %77 : vector<16x256xf32> to vector<1x16x256xf32>
    tpu.vector_store %arg6[%c0_51, %c0_52, %c0_53], %80 {strides = array<i32>} : memref<1x16x256xf32, #tpu.memory_space<vmem>>, vector<1x16x256xf32>,
    return
  }
  func.func @transform_0(%arg0: i32, %arg1: i32) -> (i32, i32, i32) {
    %c0_i32 = arith.constant 0 : i32
    %c0_i32_0 = arith.constant 0 : i32
    return %arg0, %c0_i32, %arg1 : i32, i32, i32
  }
  func.func @transform_1(%arg0: i32, %arg1: i32) -> (i32, i32, i32) {
    %c2_i32 = arith.constant 2 : i32
    %0 = arith.muli %arg1, %c2_i32 : i32
    %c1_i32 = arith.constant 1 : i32
    %1 = arith.subi %0, %c1_i32 : i32
    %c0_i32 = arith.constant 0 : i32
    %2 = arith.maxsi %1, %c0_i32 : i32
    %c0_i32_0 = arith.constant 0 : i32
    %c0_i32_1 = arith.constant 0 : i32
    return %arg0, %c0_i32_0, %2 : i32, i32, i32
  }
  func.func @transform_2(%arg0: i32, %arg1: i32) -> (i32, i32, i32) {
    %c1_i32 = arith.constant 1 : i32
    %0 = arith.addi %arg1, %c1_i32 : i32
    %c2_i32 = arith.constant 2 : i32
    %1 = arith.muli %0, %c2_i32 : i32
    %c1_i32_0 = arith.constant 1 : i32
    %2 = arith.minsi %1, %c1_i32_0 : i32
    %c0_i32 = arith.constant 0 : i32
    %c0_i32_1 = arith.constant 0 : i32
    return %arg0, %c0_i32, %2 : i32, i32, i32
  }
  func.func @transform_3(%arg0: i32, %arg1: i32) -> (i32, i32) {
    %c0_i32 = arith.constant 0 : i32
    %c0_i32_0 = arith.constant 0 : i32
    %c0_i32_1 = arith.constant 0 : i32
    return %c0_i32, %c0_i32_0 : i32, i32
  }
  func.func @transform_4(%arg0: i32, %arg1: i32) -> (i32, i32, i32) {
    %c0_i32 = arith.constant 0 : i32
    %c0_i32_0 = arith.constant 0 : i32
    return %arg0, %c0_i32, %arg1 : i32, i32, i32
  }
}

</mosaic_0001>

<llo_original>
// kernel: pshead_forward.1
$region0: #{pshead_forward.1}
  #allocation0 [shape = 'u32[]', space=smem, size = 0x4, offset = 0x4, fixed_abs, tag = 'smem constant byte address 0x4 - core index']
  #allocation1 [shape = 'u32[72,128]{1,0:T(1,128)}', space=vmem, size = 0x9000, scoped, tag = 'internal scratch']
  #allocation2 [shape = 'f32[8,512]{1,0:T(8,128)}', space=vmem, size = 0x4000, scoped, tag = 'scratch operand']
  #allocation3 [shape = 'f32[72,256]{1,0:T(8,128)}', space=vmem, size = 0x12000, scoped, tag = 'scratch operand']
  %s0 = inlined_call_operand.vmem [shape: f32[2,8,256], index: 0, kind: input, shape index: {}, may-alias: {0,1,2}]
  %s1 = inlined_call_operand.vmem [shape: f32[2,8,256], index: 1, kind: input, shape index: {}, may-alias: {0,1,2}]
  %s2 = inlined_call_operand.vmem [shape: f32[2,8,256], index: 2, kind: input, shape index: {}, may-alias: {0,1,2}]
  %s3 = inlined_call_operand.vmem [shape: f32[16,72], index: 3, kind: input, shape index: {}]
  %s4 = inlined_call_operand.vmem [shape: f32[2,16,256], index: 4, kind: output, shape index: {}]
  %s5 = sld [smem:[#allocation0]]
  $region49: #{pshead_forward.1} parent=0
    _
  %s7 = ssub.s32 1, %s5
  %s8 = scalar_select 0, %s7, %s5
  loop: start=0, step=1, limit=4
  $region2: #{pshead_forward.1} parent=0 // loop_pre_header
    _
  $region3: #{pshead_forward.1} parent=0 // loop_header
    %s10 = sphi 0, %s14
    %p11 = scmp.ge.s32.totalorder %s10, 4
    %s17 = sphi 0, %s29
    %s18 = sphi 0, %s25
    %s19 = sphi 0, %s17
    %s20 = sphi 0, %s18
    %s21 = sphi 0, %s19
    %s22 = sphi 0, %s20
    %s34 = sphi 0, %s36
    %s37 = sphi 0, %s34
    %s38 = sphi 0, %s37
    %s54 = sphi 0, %s38
    %s70 = sphi 0, %s72
    %s73 = sphi 0, %s70
    %s74 = sphi 0, %s73
    %s90 = sphi 0, %s74
    %s106 = sphi 0, %s108
    %s109 = sphi 0, %s106
    %s110 = sphi 0, %s109
    %s126 = sphi 0, %s110
    %s130 = sphi 0, %s130
    %s132 = sphi 0, %s130
    %s133 = sphi 0, %s132
    %s147 = sphi 0, %s133
    %s155 = sphi 0, %s157
    %s158 = sphi 0, %s155
    %s159 = sphi 0, %s158
    %s175 = sphi 0, %s159
  $region4: #{pshead_forward.1} parent=0 // loop_header_branch
    %13 = sbr.rel (%p11) target = $region8
  $region5: #{pshead_forward.1} parent=0 // loop_body
    %s15 = ssub.s32 %s10, 1
    %s16 = ssub.s32 %s10, 2
    %s23 = sadd.s32 1, %s18
    %p24 = scmp.ge.s32.totalorder %s23, 1
    %s25 = scalar_select %p24, 0, %s23
    %s26 = sadd.s32 1, %s17
    %s27 = scalar_select %p24, %s26, %s17
    %p28 = scmp.ge.s32.totalorder %s27, 2
    %s29 = scalar_select %p28, 0, %s27
    %s30 = ssub.s32 %s17, %s29
    %s31 = ssub.s32 %s18, %s25
    %s32 = sor.u32 %s30, %s31
    %p33 = scmp.eq.s32.totalorder %s32, 0
    %s35 = sadd.s32 %s34, 1
    %s36 = scalar_select %p33, %s34, %s35
    %p39 = pneg %p33
    %p40 = scmp.eq.s32.totalorder %s10, 1
    %p41 = por %p39, %p40
    %p42 = scmp.ne.s32.totalorder %s34, %s37
    %p43 = scmp.eq.s32.totalorder %s10, 0
    %p44 = por %p42, %p43
    %p45 = scmp.ne.s32.totalorder %s34, %s37
    %p46 = scmp.eq.s32.totalorder %s15, 1
    %p47 = por %p45, %p46
    %p48 = scmp.ne.s32.totalorder %s37, %s38
    %p49 = scmp.eq.s32.totalorder %s15, 0
    %p50 = por %p48, %p49
    %p51 = scmp.ne.s32.totalorder %s37, %s38
    %p52 = scmp.eq.s32.totalorder %s16, 1
    %p53 = por %p51, %p52
    %p55 = scmp.ne.s32.totalorder %s38, %s54
    %p56 = scmp.eq.s32.totalorder %s16, 0
    %p57 = por %p55, %p56
    %s58 = smul.u32 %s18, 2
    %s59 = ssub.s32 %s58, 1
    %p60 = scmp.gt.s32.totalorder %s59, 0
    %s61 = scalar_select %p60, %s59, 0
    %s62 = smul.u32 %s25, 2
    %s63 = ssub.s32 %s62, 1
    %p64 = scmp.gt.s32.totalorder %s63, 0
    %s65 = scalar_select %p64, %s63, 0
    %s66 = ssub.s32 %s17, %s29
    %s67 = ssub.s32 %s61, %s65
    %s68 = sor.u32 %s66, %s67
    %p69 = scmp.eq.s32.totalorder %s68, 0
    %s71 = sadd.s32 %s70, 1
    %s72 = scalar_select %p69, %s70, %s71
    %p75 = pneg %p69
    %p76 = scmp.eq.s32.totalorder %s10, 1
    %p77 = por %p75, %p76
    %p78 = scmp.ne.s32.totalorder %s70, %s73
    %p79 = scmp.eq.s32.totalorder %s10, 0
    %p80 = por %p78, %p79
    %p81 = scmp.ne.s32.totalorder %s70, %s73
    %p82 = scmp.eq.s32.totalorder %s15, 1
    %p83 = por %p81, %p82
    %p84 = scmp.ne.s32.totalorder %s73, %s74
    %p85 = scmp.eq.s32.totalorder %s15, 0
    %p86 = por %p84, %p85
    %p87 = scmp.ne.s32.totalorder %s73, %s74
    %p88 = scmp.eq.s32.totalorder %s16, 1
    %p89 = por %p87, %p88
    %p91 = scmp.ne.s32.totalorder %s74, %s90
    %p92 = scmp.eq.s32.totalorder %s16, 0
    %p93 = por %p91, %p92
    %s94 = sadd.s32 %s18, 1
    %s95 = smul.u32 %s94, 2
    %p96 = scmp.lt.s32.totalorder %s95, 1
    %s97 = scalar_select %p96, %s95, 1
    %s98 = sadd.s32 %s25, 1
    %s99 = smul.u32 %s98, 2
    %p100 = scmp.lt.s32.totalorder %s99, 1
    %s101 = scalar_select %p100, %s99, 1
    %s102 = ssub.s32 %s17, %s29
    %s103 = ssub.s32 %s97, %s101
    %s104 = sor.u32 %s102, %s103
    %p105 = scmp.eq.s32.totalorder %s104, 0
    %s107 = sadd.s32 %s106, 1
    %s108 = scalar_select %p105, %s106, %s107
    %p111 = pneg %p105
    %p112 = scmp.eq.s32.totalorder %s10, 1
    %p113 = por %p111, %p112
    %p114 = scmp.ne.s32.totalorder %s106, %s109
    %p115 = scmp.eq.s32.totalorder %s10, 0
    %p116 = por %p114, %p115
    %p117 = scmp.ne.s32.totalorder %s106, %s109
    %p118 = scmp.eq.s32.totalorder %s15, 1
    %p119 = por %p117, %p118
    %p120 = scmp.ne.s32.totalorder %s109, %s110
    %p121 = scmp.eq.s32.totalorder %s15, 0
    %p122 = por %p120, %p121
    %p123 = scmp.ne.s32.totalorder %s109, %s110
    %p124 = scmp.eq.s32.totalorder %s16, 1
    %p125 = por %p123, %p124
    %p127 = scmp.ne.s32.totalorder %s110, %s126
    %p128 = scmp.eq.s32.totalorder %s16, 0
    %p129 = por %p127, %p128
    %s131 = sadd.s32 %s130, 1
    %p134 = scmp.eq.s32.totalorder %s10, 1
    %p135 = scmp.ne.s32.totalorder %s130, %s132
    %p136 = scmp.eq.s32.totalorder %s10, 0
    %p137 = por %p135, %p136
    %p138 = scmp.ne.s32.totalorder %s130, %s132
    %p139 = scmp.eq.s32.totalorder %s15, 1
    %p140 = por %p138, %p139
    %p141 = scmp.ne.s32.totalorder %s132, %s133
    %p142 = scmp.eq.s32.totalorder %s15, 0
    %p143 = por %p141, %p142
    %p144 = scmp.ne.s32.totalorder %s132, %s133
    %p145 = scmp.eq.s32.totalorder %s16, 1
    %p146 = por %p144, %p145
    %p148 = scmp.ne.s32.totalorder %s133, %s147
    %p149 = scmp.eq.s32.totalorder %s16, 0
    %p150 = por %p148, %p149
    %s151 = ssub.s32 %s17, %s29
    %s152 = ssub.s32 %s18, %s25
    %s153 = sor.u32 %s151, %s152
    %p154 = scmp.eq.s32.totalorder %s153, 0
    %s156 = sadd.s32 %s155, 1
    %s157 = scalar_select %p154, %s155, %s156
    %p160 = pneg %p154
    %p161 = scmp.eq.s32.totalorder %s10, 1
    %p162 = por %p160, %p161
    %p163 = scmp.ne.s32.totalorder %s155, %s158
    %p164 = scmp.eq.s32.totalorder %s10, 0
    %p165 = por %p163, %p164
    %p166 = scmp.ne.s32.totalorder %s155, %s158
    %p167 = scmp.eq.s32.totalorder %s15, 1
    %p168 = por %p166, %p167
    %p169 = scmp.ne.s32.totalorder %s158, %s159
    %p170 = scmp.eq.s32.totalorder %s15, 0
    %p171 = por %p169, %p170
    %p172 = scmp.ne.s32.totalorder %s158, %s159
    %p173 = scmp.eq.s32.totalorder %s16, 1
    %p174 = por %p172, %p173
    %p176 = scmp.ne.s32.totalorder %s159, %s175
    %p177 = scmp.eq.s32.totalorder %s16, 0
    %p178 = por %p176, %p177
    %p179 = scmp.le.s32.totalorder 1, %s10
    %p180 = scmp.lt.s32.totalorder %s10, 3
    %p181 = pnand %p179, %p180
    %p182 = pneg %p181
    // Predicated region
    $region9: #{pshead_forward.1} parent=5 // pred_check
      _
    $region10: #{pshead_forward.1} parent=5 // pred_check_branch
      %184 = sbr.rel (%p181) target = $region12
    $region11: #{pshead_forward.1} parent=5 // pred_region
      %s185 = ssub.s32 %s10, 1
      // Predicated region
      $region13: #{pshead_forward.1} parent=11 // pred_check
        %p186 = pneg %p143
      $region14: #{pshead_forward.1} parent=11 // pred_check_branch
        %188 = sbr.rel (%p186) target = $region16
      $region15: #{pshead_forward.1} parent=11 // pred_region
        _
      $region16: #{pshead_forward.1} parent=11 // pred_fallthru
        _
    $region12: #{pshead_forward.1} parent=5 // pred_fallthru
      _
    %p189 = scmp.lt.s32.totalorder %s10, 2
    // Predicated region
    $region17: #{pshead_forward.1} parent=5 // pred_check
      %p190 = pneg %p189
    $region18: #{pshead_forward.1} parent=5 // pred_check_branch
      %192 = sbr.rel (%p190) target = $region20
    $region19: #{pshead_forward.1} parent=5 // pred_region
      // Predicated region
      $region21: #{pshead_forward.1} parent=19 // pred_check
        %p193 = pneg %p44
      $region22: #{pshead_forward.1} parent=19 // pred_check_branch
        %195 = sbr.rel (%p193) target = $region24
      $region23: #{pshead_forward.1} parent=19 // pred_region
        %s196 = smul.u32 2, %s18
        %p197 = scmp.lt.s32.totalorder %s17, 1
        %s198 = scalar_select %p197, %s17, 1
        %p199 = scmp.lt.s32.totalorder %s196, 1
        %s200 = scalar_select %p199, %s196, 1
        %s201 = smul.addr %s198, 2
        %s202 = sadd.s32 %s200, %s201
        %s203 = smul.addr %s202, 8
        %s204 = scalar_lea.vmem %s0, %s203
        %s205 = smul.u32 2, %s18
      $region24: #{pshead_forward.1} parent=19 // pred_fallthru
        _
      // Predicated region
      $region25: #{pshead_forward.1} parent=19 // pred_check
        %p206 = pneg %p80
      $region26: #{pshead_forward.1} parent=19 // pred_check_branch
        %208 = sbr.rel (%p206) target = $region28
      $region27: #{pshead_forward.1} parent=19 // pred_region
        %s209 = smul.u32 %s18, 2
        %s210 = ssub.s32 %s209, 1
        %p211 = scmp.gt.s32.totalorder %s210, 0
        %s212 = scalar_select %p211, %s210, 0
        %p213 = scmp.lt.s32.totalorder %s17, 1
        %s214 = scalar_select %p213, %s17, 1
        %p215 = scmp.lt.s32.totalorder %s212, 1
        %s216 = scalar_select %p215, %s212, 1
        %s217 = smul.addr %s214, 2
        %s218 = sadd.s32 %s216, %s217
        %s219 = smul.addr %s218, 8
        %s220 = scalar_lea.vmem %s1, %s219
        %s221 = smul.u32 %s18, 2
        %s222 = ssub.s32 %s221, 1
        %p223 = scmp.gt.s32.totalorder %s222, 0
        %s224 = scalar_select %p223, %s222, 0
      $region28: #{pshead_forward.1} parent=19 // pred_fallthru
        _
      // Predicated region
      $region29: #{pshead_forward.1} parent=19 // pred_check
        %p225 = pneg %p116
      $region30: #{pshead_forward.1} parent=19 // pred_check_branch
        %227 = sbr.rel (%p225) target = $region32
      $region31: #{pshead_forward.1} parent=19 // pred_region
        %s228 = sadd.s32 %s18, 1
        %s229 = smul.u32 %s228, 2
        %p230 = scmp.lt.s32.totalorder %s229, 1
        %s231 = scalar_select %p230, %s229, 1
        %p232 = scmp.lt.s32.totalorder %s17, 1
        %s233 = scalar_select %p232, %s17, 1
        %p234 = scmp.lt.s32.totalorder %s231, 1
        %s235 = scalar_select %p234, %s231, 1
        %s236 = smul.addr %s233, 2
        %s237 = sadd.s32 %s235, %s236
        %s238 = smul.addr %s237, 8
        %s239 = scalar_lea.vmem %s2, %s238
        %s240 = sadd.s32 %s18, 1
        %s241 = smul.u32 %s240, 2
        %p242 = scmp.lt.s32.totalorder %s241, 1
        %s243 = scalar_select %p242, %s241, 1
      $region32: #{pshead_forward.1} parent=19 // pred_fallthru
        _
    $region20: #{pshead_forward.1} parent=5 // pred_fallthru
      _
    %p244 = scmp.le.s32.totalorder 1, %s10
    %p245 = scmp.lt.s32.totalorder %s10, 3
    %p246 = pnand %p244, %p245
    %p247 = pneg %p246
    // Predicated region
    $region33: #{pshead_forward.1} parent=5 // pred_check
      _
    $region34: #{pshead_forward.1} parent=5 // pred_check_branch
      %249 = sbr.rel (%p246) target = $region36
    $region35: #{pshead_forward.1} parent=5 // pred_region
      %s250 = ssub.s32 %s10, 1
      %s251 = smul.u32 2, %s20
      %p252 = scmp.lt.s32.totalorder %s19, 1
      %s253 = scalar_select %p252, %s19, 1
      %p254 = scmp.lt.s32.totalorder %s251, 1
      %s255 = scalar_select %p254, %s251, 1
      %s256 = smul.addr %s253, 2
      %s257 = sadd.s32 %s255, %s256
      %s258 = smul.addr %s257, 8
      %s259 = scalar_lea.vmem %s0, %s258
      %p260 = pneg %p50
      %p261 = pneg %p47
      %s262 = smul.u32 %s20, 2
      %s263 = ssub.s32 %s262, 1
      %p264 = scmp.gt.s32.totalorder %s263, 0
      %s265 = scalar_select %p264, %s263, 0
      %p266 = scmp.lt.s32.totalorder %s19, 1
      %s267 = scalar_select %p266, %s19, 1
      %p268 = scmp.lt.s32.totalorder %s265, 1
      %s269 = scalar_select %p268, %s265, 1
      %s270 = smul.addr %s267, 2
      %s271 = sadd.s32 %s269, %s270
      %s272 = smul.addr %s271, 8
      %s273 = scalar_lea.vmem %s1, %s272
      %p274 = pneg %p86
      %p275 = pneg %p83
      %s276 = sadd.s32 %s20, 1
      %s277 = smul.u32 %s276, 2
      %p278 = scmp.lt.s32.totalorder %s277, 1
      %s279 = scalar_select %p278, %s277, 1
      %p280 = scmp.lt.s32.totalorder %s19, 1
      %s281 = scalar_select %p280, %s19, 1
      %p282 = scmp.lt.s32.totalorder %s279, 1
      %s283 = scalar_select %p282, %s279, 1
      %s284 = smul.addr %s281, 2
      %s285 = sadd.s32 %s283, %s284
      %s286 = smul.addr %s285, 8
      %s287 = scalar_lea.vmem %s2, %s286
      %p288 = pneg %p122
      %p289 = pneg %p119
      %p290 = pneg %p143
      %p291 = pneg %p140
      %p292 = pneg %p171
      %p293 = pneg %p168
      %s294 = smul.u32 2, %s20
      %p295 = scmp.lt.s32.totalorder %s19, 1
      %s296 = scalar_select %p295, %s19, 1
      %p297 = scmp.lt.s32.totalorder %s294, 1
      %s298 = scalar_select %p297, %s294, 1
      %s299 = smul.addr %s296, 4
      %s300 = sadd.s32 %s298, %s299
      %s301 = smul.addr %s300, 8
      %s302 = scalar_lea.vmem %s4, %s301
      %s303 = smul.u32 2, %s20
      %p304 = scmp.lt.s32.totalorder %s19, 1
      %s305 = scalar_select %p304, %s19, 1
      %p306 = scmp.lt.s32.totalorder %s303, 1
      %s307 = scalar_select %p306, %s303, 1
      %s308 = smul.addr %s305, 2
      %s309 = sadd.s32 %s307, %s308
      %s310 = smul.addr %s309, 8
      %s311 = scalar_lea.vmem %s0, %s310
      %s312 = smul.u32 2, %s20
      %s313 = smul.u32 %s20, 2
      %s314 = ssub.s32 %s313, 1
      %p315 = scmp.gt.s32.totalorder %s314, 0
      %s316 = scalar_select %p315, %s314, 0
      %p317 = scmp.lt.s32.totalorder %s19, 1
      %s318 = scalar_select %p317, %s19, 1
      %p319 = scmp.lt.s32.totalorder %s316, 1
      %s320 = scalar_select %p319, %s316, 1
      %s321 = smul.addr %s318, 2
      %s322 = sadd.s32 %s320, %s321
      %s323 = smul.addr %s322, 8
      %s324 = scalar_lea.vmem %s1, %s323
      %s325 = smul.u32 %s20, 2
      %s326 = ssub.s32 %s325, 1
      %p327 = scmp.gt.s32.totalorder %s326, 0
      %s328 = scalar_select %p327, %s326, 0
      %s329 = sadd.s32 %s20, 1
      %s330 = smul.u32 %s329, 2
      %p331 = scmp.lt.s32.totalorder %s330, 1
      %s332 = scalar_select %p331, %s330, 1
      %p333 = scmp.lt.s32.totalorder %s19, 1
      %s334 = scalar_select %p333, %s19, 1
      %p335 = scmp.lt.s32.totalorder %s332, 1
      %s336 = scalar_select %p335, %s332, 1
      %s337 = smul.addr %s334, 2
      %s338 = sadd.s32 %s336, %s337
      %s339 = smul.addr %s338, 8
      %s340 = scalar_lea.vmem %s2, %s339
      %s341 = sadd.s32 %s20, 1
      %s342 = smul.u32 %s341, 2
      %p343 = scmp.lt.s32.totalorder %s342, 1
      %s344 = scalar_select %p343, %s342, 1
      %s345 = smul.u32 2, %s20
      %p346 = scmp.lt.s32.totalorder %s19, 1
      %s347 = scalar_select %p346, %s19, 1
      %p348 = scmp.lt.s32.totalorder %s345, 1
      %s349 = scalar_select %p348, %s345, 1
      %s350 = smul.addr %s347, 4
      %s351 = sadd.s32 %s349, %s350
      %s352 = smul.addr %s351, 8
      %s353 = scalar_lea.vmem %s4, %s352
      %s354 = smul.u32 2, %s20
      %v355 = vld [vmem:[%s311] sm:$0xff]
      %v356 = vld [vmem:[%s311 + $0x8] sm:$0xff]
      %357 = vst [vmem:[#allocation2 + $0x8] sm:$0xff] %v355
      %358 = vst [vmem:[#allocation2 + $0x10] sm:$0xff] %v356
      %p359 = scmp.gt.s32.totalorder %s20, 0
      %v360 = vld [vmem:[%s324] sm:$0xff]
      %s361 = scalar_select %p359, 1, 0
      %v362 = vstv %s361
      %vm363 = vcmp.eq.s32.totalorder %v362, 1
      %v364 = vsel %vm363, %v360, 0.0
      %365 = vst [vmem:[#allocation2] sm:$0xff] %v364
      %p366 = scmp.lt.s32.totalorder %s20, 0
      %v367 = vld [vmem:[%s340] sm:$0xff]
      %s368 = scalar_select %p366, 1, 0
      %v369 = vstv %s368
      %vm370 = vcmp.eq.s32.totalorder %v369, 1
      %v371 = vsel %vm370, %v367, 0.0
      %372 = vst [vmem:[#allocation2 + $0x18] sm:$0xff] %v371
      %v373 = vlaneseq
      %v374 = vand.u32 %v373, 127
      %v375 = vadd.s32 %v374, 128
      %vm376 = vcmp.lt.s32.totalorder %v374, 0
      %v377 = vsub.s32 0, %v374
      %v378 = vsel %vm376, %v377, %v374
      %v379 = vshrl.u32 %v378, 4
      %v380 = vand.u32 %v378, 15
      %v381 = vsub.s32 0, %v380
      %v382 = vsel %vm376, %v381, %v380
      %vm383 = vcmp.lt.s32.totalorder %v375, 0
      %v384 = vsub.s32 0, %v375
      %v385 = vsel %vm383, %v384, %v375
      %v386 = vshrl.u32 %v385, 4
      %v387 = vand.u32 %v385, 15
      %v388 = vsub.s32 0, %v387
      %v389 = vsel %vm383, %v388, %v387
      %vm390 = vcmp.ne.s32.totalorder %v382, 0
      %vm391 = vcmp.ne.s32.totalorder %v389, 0
      %vm392 = vcmp.lt.s32.totalorder %v382, 0
      %vm393 = vcmp.lt.s32.totalorder %v389, 0
      %vm394 = vmand %vm392, %vm390
      %vm395 = vmand %vm393, %vm391
      %v396 = vadd.s32 %v382, 16
      %v397 = vadd.s32 %v389, 16
      %v398 = vsel %vm394, %v396, %v382
      %v399 = vsel %vm395, %v397, %v389
      %vm400 = vcmp.gt.s32.totalorder %v398, 0
      %vm401 = vcmp.gt.s32.totalorder %v399, 0
      %vm402 = vcmp.lt.s32.totalorder %v398, 15
      %vm403 = vcmp.lt.s32.totalorder %v399, 15
      %v404 = vld [vmem:[#allocation2] sm:$0xff]
      %v405 = vld [vmem:[#allocation2 + $0x8] sm:$0xff]
      %v406 = vld [vmem:[#allocation2 + $0x10] sm:$0xff]
      %v407 = vld [vmem:[#allocation2 + $0x18] sm:$0xff]
      %408 = vrot.lane.b32.xlu0 %v404, 16
      %v409 = vpop.permute.xlu0 %408
      %410 = vrot.lane.b32.xlu0 %v405, 16
      %v411 = vpop.permute.xlu0 %410
      %412 = vrot.lane.b32.xlu0 %v406, 16
      %v413 = vpop.permute.xlu0 %412
      %vm414 = vcmp.lt.s32.totalorder %v374, 16
      %v415 = vsel %vm414, %v411, %v413
      %v416 = vsel %vm414, %v409, %v411
      %417 = vrot.lane.b32.xlu0 %v416, 1
      %v418 = vpop.permute.xlu0 %417
      %419 = vrot.lane.b32.xlu0 %v415, 1
      %v420 = vpop.permute.xlu0 %419
      %vm421 = vcmp.lt.s32.totalorder %v374, 1
      %v422 = vsel %vm421, %v418, %v420
      %v423 = vsel %vm421, %v420, %v418
      %v424 = vsel %vm400, %v423, 0.0
      %v425 = vsel %vm401, %v422, 0.0
      %426 = vst [vmem:[#allocation3] sm:$0xff] %v424
      %427 = vst [vmem:[#allocation3 + $0x8] sm:$0xff] %v425
      %428 = vst [vmem:[#allocation3 + $0x10] sm:$0xff] %v416
      %429 = vst [vmem:[#allocation3 + $0x18] sm:$0xff] %v415
      %430 = vrot.lane.b32.xlu0 %v416, 127
      %v431 = vpop.permute.xlu0 %430
      %432 = vrot.lane.b32.xlu0 %v415, 127
      %v433 = vpop.permute.xlu0 %432
      %vm434 = vcmp.lt.s32.totalorder %v374, 127
      %v435 = vsel %vm434, %v431, %v433
      %v436 = vsel %vm434, %v433, %v431
      %v437 = vsel %vm402, %v435, 0.0
      %v438 = vsel %vm403, %v436, 0.0
      %439 = vst [vmem:[#allocation3 + $0x20] sm:$0xff] %v437
      %440 = vst [vmem:[#allocation3 + $0x28] sm:$0xff] %v438
      %v441 = vld [vmem:[%s311] sm:$0xff]
      %v442 = vld [vmem:[%s311 + $0x8] sm:$0xff]
      %443 = vrot.lane.b32.xlu0 %v441, 1
      %v444 = vpop.permute.xlu0 %443
      %445 = vrot.lane.b32.xlu0 %v442, 1
      %v446 = vpop.permute.xlu0 %445
      %v447 = vsel %vm421, %v444, %v446
      %v448 = vsel %vm421, %v446, %v444
      %v449 = vsel %vm400, %v448, 0.0
      %v450 = vsel %vm401, %v447, 0.0
      %451 = vst [vmem:[#allocation3 + $0x30] sm:$0xff] %v449
      %452 = vst [vmem:[#allocation3 + $0x38] sm:$0xff] %v450
      %453 = vst [vmem:[#allocation3 + $0x40] sm:$0xff] %v441
      %454 = vst [vmem:[#allocation3 + $0x48] sm:$0xff] %v442
      %455 = vrot.lane.b32.xlu0 %v441, 127
      %v456 = vpop.permute.xlu0 %455
      %457 = vrot.lane.b32.xlu0 %v442, 127
      %v458 = vpop.permute.xlu0 %457
      %v459 = vsel %vm434, %v456, %v458
      %v460 = vsel %vm434, %v458, %v456
      %v461 = vsel %vm402, %v459, 0.0
      %v462 = vsel %vm403, %v460, 0.0
      %463 = vst [vmem:[#allocation3 + $0x50] sm:$0xff] %v461
      %464 = vst [vmem:[#allocation3 + $0x58] sm:$0xff] %v462
      %465 = vrot.lane.b32.xlu0 %v405, 112
      %v466 = vpop.permute.xlu0 %465
      %467 = vrot.lane.b32.xlu0 %v406, 112
      %v468 = vpop.permute.xlu0 %467
      %469 = vrot.lane.b32.xlu0 %v407, 112
      %v470 = vpop.permute.xlu0 %469
      %vm471 = vcmp.lt.s32.totalorder %v374, 112
      %v472 = vsel %vm471, %v468, %v470
      %v473 = vsel %vm471, %v466, %v468
      %474 = vrot.lane.b32.xlu0 %v473, 1
      %v475 = vpop.permute.xlu0 %474
      %476 = vrot.lane.b32.xlu0 %v472, 1
      %v477 = vpop.permute.xlu0 %476
      %v478 = vsel %vm421, %v475, %v477
      %v479 = vsel %vm421, %v477, %v475
      %v480 = vsel %vm400, %v479, 0.0
      %v481 = vsel %vm401, %v478, 0.0
      %482 = vst [vmem:[#allocation3 + $0x60] sm:$0xff] %v480
      %483 = vst [vmem:[#allocation3 + $0x68] sm:$0xff] %v481
      %484 = vst [vmem:[#allocation3 + $0x70] sm:$0xff] %v473
      %485 = vst [vmem:[#allocation3 + $0x78] sm:$0xff] %v472
      %486 = vrot.lane.b32.xlu0 %v473, 127
      %v487 = vpop.permute.xlu0 %486
      %488 = vrot.lane.b32.xlu0 %v472, 127
      %v489 = vpop.permute.xlu0 %488
      %v490 = vsel %vm434, %v487, %v489
      %v491 = vsel %vm434, %v489, %v487
      %v492 = vsel %vm402, %v490, 0.0
      %v493 = vsel %vm403, %v491, 0.0
      %494 = vst [vmem:[#allocation3 + $0x80] sm:$0xff] %v492
      %495 = vst [vmem:[#allocation3 + $0x88] sm:$0xff] %v493
      %v496 = vld [vmem:[%s3] sm:$0xff]
      %v497 = vld [vmem:[%s3 + $0x8] sm:$0xff]
      %v498 = vld [vmem:[#allocation3] sm:$0xff]
      %v499 = vld [vmem:[#allocation3 + $0x8] sm:$0xff]
      %v500 = vld [vmem:[#allocation3 + $0x10] sm:$0xff]
      %v501 = vld [vmem:[#allocation3 + $0x18] sm:$0xff]
      %v502 = vld [vmem:[#allocation3 + $0x20] sm:$0xff]
      %v503 = vld [vmem:[#allocation3 + $0x28] sm:$0xff]
      %v504 = vld [vmem:[#allocation3 + $0x30] sm:$0xff]
      %v505 = vld [vmem:[#allocation3 + $0x38] sm:$0xff]
      %v506 = vld [vmem:[#allocation3 + $0x40] sm:$0xff]
      %v507 = vld [vmem:[#allocation3 + $0x48] sm:$0xff]
      %v508 = vld [vmem:[#allocation3 + $0x50] sm:$0xff]
      %v509 = vld [vmem:[#allocation3 + $0x58] sm:$0xff]
      %v510 = vld [vmem:[#allocation3 + $0x60] sm:$0xff]
      %v511 = vld [vmem:[#allocation3 + $0x68] sm:$0xff]
      %v512 = vld [vmem:[#allocation3 + $0x70] sm:$0xff]
      %v513 = vld [vmem:[#allocation3 + $0x78] sm:$0xff]
      %v514 = vld [vmem:[#allocation3 + $0x80] sm:$0xff]
      %v515 = vld [vmem:[#allocation3 + $0x88] sm:$0xff]
      %vm516 = vcmask 588800
      %v518 = vsel %vm516, %v496, 0
      %v521 = vsel %vm516, %v497, 0
      %523 = vmatpush.msra.mxu0 0.0
      %524 = vmatpush.msra.mxu0 0.0
      %525 = vmatpush.msra.mxu0 0.0
      %526 = vmatpush.msra.mxu0 0.0
      %527 = vmatpush.msra.mxu0 0.0
      %528 = vmatpush.msra.mxu0 0.0
      %529 = vmatpush.msra.mxu0 0.0
      %530 = vmatpush.msra.mxu0 %v514
      %531 = vmatpush.msra.mxu0 %v512
      %532 = vmatpush.msra.mxu0 %v510
      %533 = vmatpush.msra.mxu0 %v508
      %534 = vmatpush.msra.mxu0 %v506
      %535 = vmatpush.msra.mxu0 %v504
      %536 = vmatpush.msra.mxu0 %v502
      %537 = vmatpush.msra.mxu0 %v500
      %538 = vmatpush.msra.mxu0 %v498
      %539 = vmatmul.f32.gmra.mxu0 %v518
      %v540 = vpop.f32.mrf.mxu0
      %v541 = vadd.f32 0.0, %v540
      %542 = vmatmul.f32.gmra.mxu0 %v521
      %v543 = vpop.f32.mrf.mxu0
      %v544 = vadd.f32 0.0, %v543
      %545 = vdwg.mxu0
      %546 = vmatpush.msra.mxu0 0.0
      %547 = vmatpush.msra.mxu0 0.0
      %548 = vmatpush.msra.mxu0 0.0
      %549 = vmatpush.msra.mxu0 0.0
      %550 = vmatpush.msra.mxu0 0.0
      %551 = vmatpush.msra.mxu0 0.0
      %552 = vmatpush.msra.mxu0 0.0
      %553 = vmatpush.msra.mxu0 %v515
      %554 = vmatpush.msra.mxu0 %v513
      %555 = vmatpush.msra.mxu0 %v511
      %556 = vmatpush.msra.mxu0 %v509
      %557 = vmatpush.msra.mxu0 %v507
      %558 = vmatpush.msra.mxu0 %v505
      %559 = vmatpush.msra.mxu0 %v503
      %560 = vmatpush.msra.mxu0 %v501
      %561 = vmatpush.msra.mxu0 %v499
      %562 = vmatmul.f32.gmra.mxu0 %v518
      %v563 = vpop.f32.mrf.mxu0
      %v564 = vadd.f32 0.0, %v563
      %565 = vmatmul.f32.gmra.mxu0 %v521
      %v566 = vpop.f32.mrf.mxu0
      %v567 = vadd.f32 0.0, %v566
      %568 = vdwg.mxu0
      %v569 = vxor.u32 %v541, 2147483648
      %v570 = vxor.u32 %v564, 2147483648
      %v571 = vxor.u32 %v544, 2147483648
      %v572 = vxor.u32 %v567, 2147483648
      %v573 = vmul.f32 %v569, 1.442695
      %v574 = vpow.pop %v573
      %v575 = vmul.f32 %v570, 1.442695
      %v576 = vpow.pop %v575
      %v577 = vmul.f32 %v571, 1.442695
      %v578 = vpow.pop %v577
      %v579 = vmul.f32 %v572, 1.442695
      %v580 = vpow.pop %v579
      %v581 = vadd.f32 %v574, 1.0
      %v582 = vadd.f32 %v576, 1.0
      %v583 = vadd.f32 %v578, 1.0
      %v584 = vadd.f32 %v580, 1.0
      %v585 = vrcp.pop %v581
      %v586 = vmul.f32 %v581, %v585
      %v587 = vsub.f32 1.0, %v586
      %v588 = vmul.f32 %v585, %v587
      %v589 = vadd.f32 %v585, %v588
      %vm590 = vweird.f32 %v581
      %vm591 = vweird.f32 %v585
      %vm592 = vmor %vm590, %vm591
      %v593 = vsel %vm592, %v585, %v589
      %v594 = vand.u32 2147483647, %v581
      %vm595 = vcmp.eq.f32.partialorder %v594, 8.507059e+37
      %v596 = vand.u32 %v581, 2147483648
      %v597 = vor.u32 1.1754944e-38, %v596
      %v598 = vsel %vm595, %v597, %v593
      %v599 = vmul.f32 1.0, %v598
      %v600 = vrcp.pop %v582
      %v601 = vmul.f32 %v582, %v600
      %v602 = vsub.f32 1.0, %v601
      %v603 = vmul.f32 %v600, %v602
      %v604 = vadd.f32 %v600, %v603
      %vm605 = vweird.f32 %v582
      %vm606 = vweird.f32 %v600
      %vm607 = vmor %vm605, %vm606
      %v608 = vsel %vm607, %v600, %v604
      %v609 = vand.u32 2147483647, %v582
      %vm610 = vcmp.eq.f32.partialorder %v609, 8.507059e+37
      %v611 = vand.u32 %v582, 2147483648
      %v612 = vor.u32 1.1754944e-38, %v611
      %v613 = vsel %vm610, %v612, %v608
      %v614 = vmul.f32 1.0, %v613
      %v615 = vrcp.pop %v583
      %v616 = vmul.f32 %v583, %v615
      %v617 = vsub.f32 1.0, %v616
      %v618 = vmul.f32 %v615, %v617
      %v619 = vadd.f32 %v615, %v618
      %vm620 = vweird.f32 %v583
      %vm621 = vweird.f32 %v615
      %vm622 = vmor %vm620, %vm621
      %v623 = vsel %vm622, %v615, %v619
      %v624 = vand.u32 2147483647, %v583
      %vm625 = vcmp.eq.f32.partialorder %v624, 8.507059e+37
      %v626 = vand.u32 %v583, 2147483648
      %v627 = vor.u32 1.1754944e-38, %v626
      %v628 = vsel %vm625, %v627, %v623
      %v629 = vmul.f32 1.0, %v628
      %v630 = vrcp.pop %v584
      %v631 = vmul.f32 %v584, %v630
      %v632 = vsub.f32 1.0, %v631
      %v633 = vmul.f32 %v630, %v632
      %v634 = vadd.f32 %v630, %v633
      %vm635 = vweird.f32 %v584
      %vm636 = vweird.f32 %v630
      %vm637 = vmor %vm635, %vm636
      %v638 = vsel %vm637, %v630, %v634
      %v639 = vand.u32 2147483647, %v584
      %vm640 = vcmp.eq.f32.partialorder %v639, 8.507059e+37
      %v641 = vand.u32 %v584, 2147483648
      %v642 = vor.u32 1.1754944e-38, %v641
      %v643 = vsel %vm640, %v642, %v638
      %v644 = vmul.f32 1.0, %v643
      %645 = vst [vmem:[%s353] sm:$0xff] %v599
      %646 = vst [vmem:[%s353 + $0x8] sm:$0xff] %v614
      %647 = vst [vmem:[%s353 + $0x10] sm:$0xff] %v629
      %648 = vst [vmem:[%s353 + $0x18] sm:$0xff] %v644
      %s649 = smul.u32 2, %s20
      %p650 = scmp.lt.s32.totalorder %s19, 1
      %s651 = scalar_select %p650, %s19, 1
      %p652 = scmp.lt.s32.totalorder %s649, 1
      %s653 = scalar_select %p652, %s649, 1
      %s654 = smul.addr %s651, 4
      %s655 = sadd.s32 %s653, %s654
      %s656 = smul.addr %s655, 8
      %s657 = scalar_lea.vmem %s4, %s656
      // Predicated region
      $region37: #{pshead_forward.1} parent=35 // pred_check
        %p658 = pneg %p168
      $region38: #{pshead_forward.1} parent=35 // pred_check_branch
        %660 = sbr.rel (%p658) target = $region40
      $region39: #{pshead_forward.1} parent=35 // pred_region
        %s661 = smul.u32 2, %s20
      $region40: #{pshead_forward.1} parent=35 // pred_fallthru
        _
    $region36: #{pshead_forward.1} parent=5 // pred_fallthru
      _
    %p662 = scmp.le.s32.totalorder 2, %s10
    // Predicated region
    $region41: #{pshead_forward.1} parent=5 // pred_check
      %p663 = pneg %p662
    $region42: #{pshead_forward.1} parent=5 // pred_check_branch
      %665 = sbr.rel (%p663) target = $region44
    $region43: #{pshead_forward.1} parent=5 // pred_region
      %s666 = ssub.s32 %s10, 2
      // Predicated region
      $region45: #{pshead_forward.1} parent=43 // pred_check
        %p667 = pneg %p174
      $region46: #{pshead_forward.1} parent=43 // pred_check_branch
        %669 = sbr.rel (%p667) target = $region48
      $region47: #{pshead_forward.1} parent=43 // pred_region
        %s670 = smul.u32 2, %s22
        %p671 = scmp.lt.s32.totalorder %s21, 1
        %s672 = scalar_select %p671, %s21, 1
        %p673 = scmp.lt.s32.totalorder %s670, 1
        %s674 = scalar_select %p673, %s670, 1
        %s675 = smul.addr %s672, 4
        %s676 = sadd.s32 %s674, %s675
        %s677 = smul.addr %s676, 8
        %s678 = scalar_lea.vmem %s4, %s677
      $region48: #{pshead_forward.1} parent=43 // pred_fallthru
        _
    $region44: #{pshead_forward.1} parent=5 // pred_fallthru
      _
  $region6: #{pshead_forward.1} parent=0 // loop_footer
    %s14 = sadd.s32 1, %s10
  $region7: #{pshead_forward.1} parent=0 // loop_footer_branch
    %9 = sbr.rel target = $region3
  $region8: #{pshead_forward.1} parent=0 // loop_exit
    _

</llo_original>
